<compile_context>
chip_gen: v6e
topology: v6e:2x2x1
jax: 0.10.0
libtpu: 0.0.40
codegen_flags: <defaults>
</compile_context>

<pallas_src>
import math
import functools

import jax
import jax.numpy as jnp
from jax import lax
from jax.experimental import pallas as pl
from jax.experimental.pallas import tpu as pltpu


def _flash_attend(q, k, v, kv_chunk):
    """Online-softmax attention for one head.

    q: (T, hs) bf16 (already scaled by 1/sqrt(hs) via the weights)
    k, v: (T, hs) bf16.  Returns (T, hs) f32.
    The KV axis is swept in static chunks so the (T, T) score matrix is never
    fully materialized.
    """
    T = k.shape[0]
    hs = q.shape[1]
    n_chunks = (T + kv_chunk - 1) // kv_chunk

    m = jnp.full((q.shape[0], 1), -jnp.inf, jnp.float32)
    l = jnp.zeros((q.shape[0], 1), jnp.float32)
    acc = jnp.zeros((q.shape[0], hs), jnp.float32)

    for c in range(n_chunks):
        ks = k[c * kv_chunk:(c + 1) * kv_chunk]
        vs = v[c * kv_chunk:(c + 1) * kv_chunk]
        # q @ ks^T without materializing a transpose.
        s = lax.dot_general(q, ks, (((1,), (1,)), ((), ())),
                            preferred_element_type=jnp.float32)      # (T, chunk)
        m_new = jnp.maximum(m, jnp.max(s, axis=-1, keepdims=True))
        alpha = jnp.exp(m - m_new)
        p = jnp.exp(s - m_new)
        l = alpha * l + jnp.sum(p, axis=-1, keepdims=True)
        acc = alpha * acc + jnp.dot(p.astype(jnp.bfloat16), vs,
                                    preferred_element_type=jnp.float32)
        m = m_new

    # Normalize after the PV matmul (T*hs multiplies, not T*T); exact reciprocal
    # is essentially free (only T values per head).
    return acc * pl.reciprocal(l, approx=False)


def _mha_fused_kernel(x_ref, wqkv_ref, wp_ref, bias_ref, o_ref, *,
                      head_size, heads_per_block, kv_chunk):
    hg = pl.program_id(1)
    T = x_ref.shape[1]
    E = x_ref.shape[2]
    hb, hs = heads_per_block, head_size

    # Initialize the resident (T, E) output block with the projection bias on
    # the first head group; it stays in VMEM across the whole head-group sweep.
    @pl.when(hg == 0)
    def _():
        o_ref[0] = jnp.broadcast_to(bias_ref[...], (T, E)).astype(o_ref.dtype)

    x = x_ref[0]        # (T, E)            bf16
    wqkv = wqkv_ref[0]  # (E, 3*Hb*hs)      bf16, columns = [Q_all | K_all | V_all]
    wp = wp_ref[0]      # (Hb*hs, E)        bf16, slice of W_proj^T

    # Fused Q/K/V projection for all heads in the group: one wide MXU matmul,
    # f32 accumulation.  Q columns were pre-scaled by 1/sqrt(hs) host-side.
    qkv = jnp.dot(x, wqkv, preferred_element_type=jnp.float32)  # (T, 3*Hb*hs)

    head_outs = []
    for i in range(hb):
        q = qkv[:, i * hs:(i + 1) * hs].astype(jnp.bfloat16)
        k = qkv[:, (hb + i) * hs:(hb + i + 1) * hs].astype(jnp.bfloat16)
        v = qkv[:, (2 * hb + i) * hs:(2 * hb + i + 1) * hs].astype(jnp.bfloat16)
        o = _flash_attend(q, k, v, kv_chunk)                     # (T, hs) f32
        head_outs.append(o.astype(jnp.bfloat16))

    o_all = head_outs[0] if hb == 1 else jnp.concatenate(head_outs, axis=-1)

    # Accumulate this head group's slice of the output projection directly into
    # the resident output block (K = Hb*hs deep matmul).
    o_ref[0] += jnp.dot(o_all, wp, preferred_element_type=jnp.float32).astype(o_ref.dtype)


def _pick_heads_per_block(num_heads, head_size):
    """Largest divisor of num_heads with heads_per_block * head_size <~ 256."""
    target = max(1, 256 // max(head_size, 1))
    hb = 1
    for cand in range(1, num_heads + 1):
        if num_heads % cand == 0 and cand <= target:
            hb = cand
    return hb


def _vmem_limit_bytes():
    """Generation-aware VMEM budget: ~3/4 of physical, capped at 100 MiB
    (-> ~96 MiB on v5e/v6e with 128 MiB, ~48 MiB on v7x with 64 MiB)."""
    try:
        cap = int(pltpu.get_tpu_info().vmem_capacity_bytes)
    except Exception:
        cap = 64 * 1024 * 1024
    return min(cap * 3 // 4, 100 * 1024 * 1024)


def multi_head_attention(x, wq, wk, wv, w_proj, b_proj):
    """x: (B, T, E); wq/wk/wv: (H, hs, E) (nn.Linear layout: (out, in));
    w_proj: (E, E); b_proj: (E,)."""
    B, T, E = x.shape
    H, hs, _ = wq.shape
    assert H * hs == E, "output projection requires num_heads * head_size == n_embd"

    hb = _pick_heads_per_block(H, hs)
    G = H // hb
    kv_chunk = min(T, 512)

    # ---- Host-side (one-time) weight repacking ------------------------------
    scale = 1.0 / math.sqrt(hs)

    def pack_group(w):  # (H, hs, E) -> (G, E, hb*hs), per-group column-major over heads
        wT = jnp.transpose(w, (0, 2, 1))                      # (H, E, hs)
        return wT.reshape(G, hb, E, hs).transpose(0, 2, 1, 3).reshape(G, E, hb * hs)

    wqkv = jnp.concatenate(
        [pack_group(wq * scale), pack_group(wk), pack_group(wv)],
        axis=-1).astype(jnp.bfloat16)                         # (G, E, 3*hb*hs)
    wp_groups = w_proj.T.reshape(G, hb * hs, E).astype(jnp.bfloat16)   # (G, hb*hs, E)
    bias2d = b_proj.reshape(1, E).astype(jnp.float32)
    xb = x.astype(jnp.bfloat16)

    kernel = functools.partial(_mha_fused_kernel, head_size=hs,
                               heads_per_block=hb, kv_chunk=kv_chunk)

    return pl.pallas_call(
        kernel,
        out_shape=jax.ShapeDtypeStruct((B, T, E), jnp.float32),
        grid_spec=pltpu.PrefetchScalarGridSpec(
            num_scalar_prefetch=0,
            grid=(B, G),                                      # head-group axis innermost: reduction
            in_specs=[
                pl.BlockSpec((1, T, E), lambda b, g: (b, 0, 0)),            # x (resident across g)
                pl.BlockSpec((1, E, 3 * hb * hs), lambda b, g: (g, 0, 0)),  # fused QKV weights
                pl.BlockSpec((1, hb * hs, E), lambda b, g: (g, 0, 0)),      # proj weight slice
                pl.BlockSpec((1, E), lambda b, g: (0, 0)),                  # proj bias
            ],
            out_specs=pl.BlockSpec((1, T, E), lambda b, g: (b, 0, 0)),      # resident accumulator
        ),
        compiler_params=pltpu.CompilerParams(
            dimension_semantics=("parallel", "arbitrary"),
            vmem_limit_bytes=_vmem_limit_bytes(),
        ),
    )(xb, wqkv, wp_groups, bias2d)


def _reference(x, wq, wk, wv, w_proj, b_proj):
    """Pure-JAX f32 reference matching the PyTorch forward."""
    H, hs, E = wq.shape
    q = jnp.einsum("bte,hse->bhts", x, wq)
    k = jnp.einsum("bte,hse->bhts", x, wk)
    v = jnp.einsum("bte,hse->bhts", x, wv)
    s = jnp.einsum("bhts,bhus->bhtu", q, k) / math.sqrt(hs)
    p = jax.nn.softmax(s, axis=-1)
    o = jnp.einsum("bhtu,bhus->bhts", p, v)
    y = jnp.transpose(o, (0, 2, 1, 3)).reshape(x.shape[0], x.shape[1], H * hs)
    return y @ w_proj.T + b_proj


if __name__ == "__main__":
    # Small shapes consistent with the module: num_heads * head_size == n_embd.
    B, T = 2, 8
    num_heads, head_size = 4, 8
    n_embd = num_heads * head_size          # 32
    block_size = T                           # unused by forward (no causal mask applied)

    key = jax.random.PRNGKey(0)
    kx, kq, kk, kv, kpw, kpb = jax.random.split(key, 6)

    # Deterministic parameter init (PyTorch Linear default: U(-1/sqrt(fan_in), 1/sqrt(fan_in))).
    bound_h = 1.0 / math.sqrt(n_embd)
    wq = jax.random.uniform(kq, (num_heads, head_size, n_embd), jnp.float32, -bound_h, bound_h)
    wk = jax.random.uniform(kk, (num_heads, head_size, n_embd), jnp.float32, -bound_h, bound_h)
    wv = jax.random.uniform(kv, (num_heads, head_size, n_embd), jnp.float32, -bound_h, bound_h)
    w_proj = jax.random.uniform(kpw, (n_embd, n_embd), jnp.float32, -bound_h, bound_h)
    b_proj = jax.random.uniform(kpb, (n_embd,), jnp.float32, -bound_h, bound_h)

    x = jax.random.normal(kx, (B, T, n_embd), jnp.float32)

    out = multi_head_attention(x, wq, wk, wv, w_proj, b_proj)
    out = jax.block_until_ready(out)

    ref = _reference(x, wq, wk, wv, w_proj, b_proj)
    assert out.shape == (B, T, n_embd)
    # bf16 MXU operands (f32 accumulation) dominate the residual error.
    assert jnp.allclose(out, ref, atol=5e-2, rtol=5e-2), "mismatch vs pure-JAX reference"

    print("KERNEL_OK")
</pallas_src>

<mosaic_0001>
module attributes {stable_mosaic.version = 11 : i64} {
  func.func @_mha_fused_kernel(%arg0: i32, %arg1: i32, %arg2: memref<1x8x32xbf16, #tpu.memory_space<vmem>>, %arg3: memref<1x32x96xbf16, #tpu.memory_space<vmem>>, %arg4: memref<1x32x32xbf16, #tpu.memory_space<vmem>>, %arg5: memref<1x32xf32, #tpu.memory_space<vmem>>, %arg6: memref<1x8x32xf32, #tpu.memory_space<vmem>>) attributes {dimension_semantics = [#tpu.dimension_semantics<parallel>, #tpu.dimension_semantics<arbitrary>], iteration_bounds = array<i64: 2, 1>, scalar_prefetch = 0 : i64, scratch_operands = 0 : i64, tpu.core_type = #tpu.core_type<tc>, window_params = [{transform_indices = @transform_0, window_bounds = array<i64: 1, 8, 32>}, {transform_indices = @transform_1, window_bounds = array<i64: 1, 32, 96>}, {transform_indices = @transform_2, window_bounds = array<i64: 1, 32, 32>}, {pipeline_mode = #tpu.pipeline_mode<synchronous>, transform_indices = @transform_3, window_bounds = array<i64: 1, 32>}, {transform_indices = @transform_4, window_bounds = array<i64: 1, 8, 32>}]} {
    %c0_i32 = arith.constant 0 : i32
    %0 = arith.cmpi eq, %arg1, %c0_i32 : i32
    %1 = arith.extui %0 : i1 to i32
    %c0_i32_0 = arith.constant 0 : i32
    %2 = arith.cmpi ne, %1, %c0_i32_0 : i32
    scf.if %2 {
      %c0_44 = arith.constant 0 : index
      %c0_45 = arith.constant 0 : index
      %142 = vector.load %arg5[%c0_44, %c0_45] : memref<1x32xf32, #tpu.memory_space<vmem>>, vector<1x32xf32>
      %143 = vector.shape_cast %142 : vector<1x32xf32> to vector<1x32xf32>
      %144 = vector.broadcast %143 : vector<1x32xf32> to vector<8x32xf32>
      %c0_46 = arith.constant 0 : index
      %c0_47 = arith.constant 0 : index
      %c0_48 = arith.constant 0 : index
      %145 = vector.load %arg6[%c0_46, %c0_47, %c0_48] : memref<1x8x32xf32, #tpu.memory_space<vmem>>, vector<1x8x32xf32>
      %146 = vector.shape_cast %145 : vector<1x8x32xf32> to vector<8x32xf32>
      %147 = vector.shape_cast %144 : vector<8x32xf32> to vector<1x8x32xf32>
      tpu.vector_store %arg6[%c0_46, %c0_47, %c0_48], %147 {strides = array<i32>} : memref<1x8x32xf32, #tpu.memory_space<vmem>>, vector<1x8x32xf32>,
    } else {
    }
    %c0 = arith.constant 0 : index
    %c0_1 = arith.constant 0 : index
    %c0_2 = arith.constant 0 : index
    %3 = vector.load %arg2[%c0, %c0_1, %c0_2] : memref<1x8x32xbf16, #tpu.memory_space<vmem>>, vector<1x8x32xbf16>
    %4 = vector.shape_cast %3 : vector<1x8x32xbf16> to vector<8x32xbf16>
    %c0_3 = arith.constant 0 : index
    %c0_4 = arith.constant 0 : index
    %c0_5 = arith.constant 0 : index
    %5 = vector.load %arg3[%c0_3, %c0_4, %c0_5] : memref<1x32x96xbf16, #tpu.memory_space<vmem>>, vector<1x32x96xbf16>
    %6 = vector.shape_cast %5 : vector<1x32x96xbf16> to vector<32x96xbf16>
    %c0_6 = arith.constant 0 : index
    %c0_7 = arith.constant 0 : index
    %c0_8 = arith.constant 0 : index
    %7 = vector.load %arg4[%c0_6, %c0_7, %c0_8] : memref<1x32x32xbf16, #tpu.memory_space<vmem>>, vector<1x32x32xbf16>
    %8 = vector.shape_cast %7 : vector<1x32x32xbf16> to vector<32x32xbf16>
    %cst = arith.constant dense<0.000000e+00> : vector<8x96xf32>
    %9 = tpu.matmul %4, %6, %cst {dimension_numbers = #tpu.dot_dimension_numbers<[1], [0], [0], [1], [0, 0, 1, 1], [], []>} : vector<8x32xbf16>, vector<32x96xbf16>, vector<8x96xf32> -> vector<8x96xf32>
    %10 = vector.extract_strided_slice %9 {offsets = [0, 0], sizes = [8, 8], strides = [1, 1]} : vector<8x96xf32> to vector<8x8xf32>
    %11 = arith.truncf %10 : vector<8x8xf32> to vector<8x8xbf16>
    %12 = vector.extract_strided_slice %9 {offsets = [0, 32], sizes = [8, 8], strides = [1, 1]} : vector<8x96xf32> to vector<8x8xf32>
    %13 = arith.truncf %12 : vector<8x8xf32> to vector<8x8xbf16>
    %14 = vector.extract_strided_slice %9 {offsets = [0, 64], sizes = [8, 8], strides = [1, 1]} : vector<8x96xf32> to vector<8x8xf32>
    %15 = arith.truncf %14 : vector<8x8xf32> to vector<8x8xbf16>
    %cst_9 = arith.constant 0xFF800000 : f32
    %16 = vector.broadcast %cst_9 : f32 to vector<8x1xf32>
    %cst_10 = arith.constant 0.000000e+00 : f32
    %17 = vector.broadcast %cst_10 : f32 to vector<8x1xf32>
    %cst_11 = arith.constant 0.000000e+00 : f32
    %18 = vector.broadcast %cst_11 : f32 to vector<8x8xf32>
    %cst_12 = arith.constant dense<0.000000e+00> : vector<8x8xf32>
    %19 = tpu.matmul %11, %13, %cst_12 {dimension_numbers = #tpu.dot_dimension_numbers<[1], [1], [0], [0], [0, 0, 1, 0], [], []>} : vector<8x8xbf16>, vector<8x8xbf16>, vector<8x8xf32> -> vector<8x8xf32>
    %cst_13 = arith.constant dense<0xFF800000> : vector<8xf32>
    %20 = vector.multi_reduction <maximumf>, %19, %cst_13 [1] : vector<8x8xf32> to vector<8xf32>
    %21 = vector.shape_cast %20 : vector<8xf32> to vector<8x1xf32>
    %22 = arith.maximumf %16, %21 : vector<8x1xf32>
    %23 = arith.subf %16, %22 : vector<8x1xf32>
    %24 = math.exp %23 : vector<8x1xf32>
    %25 = vector.broadcast %22 : vector<8x1xf32> to vector<8x8xf32>
    %26 = arith.subf %19, %25 : vector<8x8xf32>
    %27 = math.exp %26 : vector<8x8xf32>
    %28 = arith.mulf %24, %17 : vector<8x1xf32>
    %cst_14 = arith.constant dense<0.000000e+00> : vector<8xf32>
    %29 = vector.multi_reduction <add>, %27, %cst_14 [1] : vector<8x8xf32> to vector<8xf32>
    %30 = vector.shape_cast %29 : vector<8xf32> to vector<8x1xf32>
    %31 = arith.addf %28, %30 : vector<8x1xf32>
    %32 = vector.broadcast %24 : vector<8x1xf32> to vector<8x8xf32>
    %33 = arith.mulf %32, %18 : vector<8x8xf32>
    %34 = arith.truncf %27 : vector<8x8xf32> to vector<8x8xbf16>
    %cst_15 = arith.constant dense<0.000000e+00> : vector<8x8xf32>
    %35 = tpu.matmul %34, %15, %cst_15 {dimension_numbers = #tpu.dot_dimension_numbers<[1], [0], [0], [1], [0, 0, 1, 1], [], []>} : vector<8x8xbf16>, vector<8x8xbf16>, vector<8x8xf32> -> vector<8x8xf32>
    %36 = arith.addf %33, %35 : vector<8x8xf32>
    %37 = tpu.reciprocal %31 : vector<8x1xf32> -> vector<8x1xf32>
    %38 = vector.broadcast %37 : vector<8x1xf32> to vector<8x8xf32>
    %39 = arith.mulf %36, %38 : vector<8x8xf32>
    %40 = arith.truncf %39 : vector<8x8xf32> to vector<8x8xbf16>
    %41 = vector.extract_strided_slice %9 {offsets = [0, 8], sizes = [8, 8], strides = [1, 1]} : vector<8x96xf32> to vector<8x8xf32>
    %42 = arith.truncf %41 : vector<8x8xf32> to vector<8x8xbf16>
    %43 = vector.extract_strided_slice %9 {offsets = [0, 40], sizes = [8, 8], strides = [1, 1]} : vector<8x96xf32> to vector<8x8xf32>
    %44 = arith.truncf %43 : vector<8x8xf32> to vector<8x8xbf16>
    %45 = vector.extract_strided_slice %9 {offsets = [0, 72], sizes = [8, 8], strides = [1, 1]} : vector<8x96xf32> to vector<8x8xf32>
    %46 = arith.truncf %45 : vector<8x8xf32> to vector<8x8xbf16>
    %cst_16 = arith.constant 0xFF800000 : f32
    %47 = vector.broadcast %cst_16 : f32 to vector<8x1xf32>
    %cst_17 = arith.constant 0.000000e+00 : f32
    %48 = vector.broadcast %cst_17 : f32 to vector<8x1xf32>
    %cst_18 = arith.constant 0.000000e+00 : f32
    %49 = vector.broadcast %cst_18 : f32 to vector<8x8xf32>
    %cst_19 = arith.constant dense<0.000000e+00> : vector<8x8xf32>
    %50 = tpu.matmul %42, %44, %cst_19 {dimension_numbers = #tpu.dot_dimension_numbers<[1], [1], [0], [0], [0, 0, 1, 0], [], []>} : vector<8x8xbf16>, vector<8x8xbf16>, vector<8x8xf32> -> vector<8x8xf32>
    %cst_20 = arith.constant dense<0xFF800000> : vector<8xf32>
    %51 = vector.multi_reduction <maximumf>, %50, %cst_20 [1] : vector<8x8xf32> to vector<8xf32>
    %52 = vector.shape_cast %51 : vector<8xf32> to vector<8x1xf32>
    %53 = arith.maximumf %47, %52 : vector<8x1xf32>
    %54 = arith.subf %47, %53 : vector<8x1xf32>
    %55 = math.exp %54 : vector<8x1xf32>
    %56 = vector.broadcast %53 : vector<8x1xf32> to vector<8x8xf32>
    %57 = arith.subf %50, %56 : vector<8x8xf32>
    %58 = math.exp %57 : vector<8x8xf32>
    %59 = arith.mulf %55, %48 : vector<8x1xf32>
    %cst_21 = arith.constant dense<0.000000e+00> : vector<8xf32>
    %60 = vector.multi_reduction <add>, %58, %cst_21 [1] : vector<8x8xf32> to vector<8xf32>
    %61 = vector.shape_cast %60 : vector<8xf32> to vector<8x1xf32>
    %62 = arith.addf %59, %61 : vector<8x1xf32>
    %63 = vector.broadcast %55 : vector<8x1xf32> to vector<8x8xf32>
    %64 = arith.mulf %63, %49 : vector<8x8xf32>
    %65 = arith.truncf %58 : vector<8x8xf32> to vector<8x8xbf16>
    %cst_22 = arith.constant dense<0.000000e+00> : vector<8x8xf32>
    %66 = tpu.matmul %65, %46, %cst_22 {dimension_numbers = #tpu.dot_dimension_numbers<[1], [0], [0], [1], [0, 0, 1, 1], [], []>} : vector<8x8xbf16>, vector<8x8xbf16>, vector<8x8xf32> -> vector<8x8xf32>
    %67 = arith.addf %64, %66 : vector<8x8xf32>
    %68 = tpu.reciprocal %62 : vector<8x1xf32> -> vector<8x1xf32>
    %69 = vector.broadcast %68 : vector<8x1xf32> to vector<8x8xf32>
    %70 = arith.mulf %67, %69 : vector<8x8xf32>
    %71 = arith.truncf %70 : vector<8x8xf32> to vector<8x8xbf16>
    %72 = vector.extract_strided_slice %9 {offsets = [0, 16], sizes = [8, 8], strides = [1, 1]} : vector<8x96xf32> to vector<8x8xf32>
    %73 = arith.truncf %72 : vector<8x8xf32> to vector<8x8xbf16>
    %74 = vector.extract_strided_slice %9 {offsets = [0, 48], sizes = [8, 8], strides = [1, 1]} : vector<8x96xf32> to vector<8x8xf32>
    %75 = arith.truncf %74 : vector<8x8xf32> to vector<8x8xbf16>
    %76 = vector.extract_strided_slice %9 {offsets = [0, 80], sizes = [8, 8], strides = [1, 1]} : vector<8x96xf32> to vector<8x8xf32>
    %77 = arith.truncf %76 : vector<8x8xf32> to vector<8x8xbf16>
    %cst_23 = arith.constant 0xFF800000 : f32
    %78 = vector.broadcast %cst_23 : f32 to vector<8x1xf32>
    %cst_24 = arith.constant 0.000000e+00 : f32
    %79 = vector.broadcast %cst_24 : f32 to vector<8x1xf32>
    %cst_25 = arith.constant 0.000000e+00 : f32
    %80 = vector.broadcast %cst_25 : f32 to vector<8x8xf32>
    %cst_26 = arith.constant dense<0.000000e+00> : vector<8x8xf32>
    %81 = tpu.matmul %73, %75, %cst_26 {dimension_numbers = #tpu.dot_dimension_numbers<[1], [1], [0], [0], [0, 0, 1, 0], [], []>} : vector<8x8xbf16>, vector<8x8xbf16>, vector<8x8xf32> -> vector<8x8xf32>
    %cst_27 = arith.constant dense<0xFF800000> : vector<8xf32>
    %82 = vector.multi_reduction <maximumf>, %81, %cst_27 [1] : vector<8x8xf32> to vector<8xf32>
    %83 = vector.shape_cast %82 : vector<8xf32> to vector<8x1xf32>
    %84 = arith.maximumf %78, %83 : vector<8x1xf32>
    %85 = arith.subf %78, %84 : vector<8x1xf32>
    %86 = math.exp %85 : vector<8x1xf32>
    %87 = vector.broadcast %84 : vector<8x1xf32> to vector<8x8xf32>
    %88 = arith.subf %81, %87 : vector<8x8xf32>
    %89 = math.exp %88 : vector<8x8xf32>
    %90 = arith.mulf %86, %79 : vector<8x1xf32>
    %cst_28 = arith.constant dense<0.000000e+00> : vector<8xf32>
    %91 = vector.multi_reduction <add>, %89, %cst_28 [1] : vector<8x8xf32> to vector<8xf32>
    %92 = vector.shape_cast %91 : vector<8xf32> to vector<8x1xf32>
    %93 = arith.addf %90, %92 : vector<8x1xf32>
    %94 = vector.broadcast %86 : vector<8x1xf32> to vector<8x8xf32>
    %95 = arith.mulf %94, %80 : vector<8x8xf32>
    %96 = arith.truncf %89 : vector<8x8xf32> to vector<8x8xbf16>
    %cst_29 = arith.constant dense<0.000000e+00> : vector<8x8xf32>
    %97 = tpu.matmul %96, %77, %cst_29 {dimension_numbers = #tpu.dot_dimension_numbers<[1], [0], [0], [1], [0, 0, 1, 1], [], []>} : vector<8x8xbf16>, vector<8x8xbf16>, vector<8x8xf32> -> vector<8x8xf32>
    %98 = arith.addf %95, %97 : vector<8x8xf32>
    %99 = tpu.reciprocal %93 : vector<8x1xf32> -> vector<8x1xf32>
    %100 = vector.broadcast %99 : vector<8x1xf32> to vector<8x8xf32>
    %101 = arith.mulf %98, %100 : vector<8x8xf32>
    %102 = arith.truncf %101 : vector<8x8xf32> to vector<8x8xbf16>
    %103 = vector.extract_strided_slice %9 {offsets = [0, 24], sizes = [8, 8], strides = [1, 1]} : vector<8x96xf32> to vector<8x8xf32>
    %104 = arith.truncf %103 : vector<8x8xf32> to vector<8x8xbf16>
    %105 = vector.extract_strided_slice %9 {offsets = [0, 56], sizes = [8, 8], strides = [1, 1]} : vector<8x96xf32> to vector<8x8xf32>
    %106 = arith.truncf %105 : vector<8x8xf32> to vector<8x8xbf16>
    %107 = vector.extract_strided_slice %9 {offsets = [0, 88], sizes = [8, 8], strides = [1, 1]} : vector<8x96xf32> to vector<8x8xf32>
    %108 = arith.truncf %107 : vector<8x8xf32> to vector<8x8xbf16>
    %cst_30 = arith.constant 0xFF800000 : f32
    %109 = vector.broadcast %cst_30 : f32 to vector<8x1xf32>
    %cst_31 = arith.constant 0.000000e+00 : f32
    %110 = vector.broadcast %cst_31 : f32 to vector<8x1xf32>
    %cst_32 = arith.constant 0.000000e+00 : f32
    %111 = vector.broadcast %cst_32 : f32 to vector<8x8xf32>
    %cst_33 = arith.constant dense<0.000000e+00> : vector<8x8xf32>
    %112 = tpu.matmul %104, %106, %cst_33 {dimension_numbers = #tpu.dot_dimension_numbers<[1], [1], [0], [0], [0, 0, 1, 0], [], []>} : vector<8x8xbf16>, vector<8x8xbf16>, vector<8x8xf32> -> vector<8x8xf32>
    %cst_34 = arith.constant dense<0xFF800000> : vector<8xf32>
    %113 = vector.multi_reduction <maximumf>, %112, %cst_34 [1] : vector<8x8xf32> to vector<8xf32>
    %114 = vector.shape_cast %113 : vector<8xf32> to vector<8x1xf32>
    %115 = arith.maximumf %109, %114 : vector<8x1xf32>
    %116 = arith.subf %109, %115 : vector<8x1xf32>
    %117 = math.exp %116 : vector<8x1xf32>
    %118 = vector.broadcast %115 : vector<8x1xf32> to vector<8x8xf32>
    %119 = arith.subf %112, %118 : vector<8x8xf32>
    %120 = math.exp %119 : vector<8x8xf32>
    %121 = arith.mulf %117, %110 : vector<8x1xf32>
    %cst_35 = arith.constant dense<0.000000e+00> : vector<8xf32>
    %122 = vector.multi_reduction <add>, %120, %cst_35 [1] : vector<8x8xf32> to vector<8xf32>
    %123 = vector.shape_cast %122 : vector<8xf32> to vector<8x1xf32>
    %124 = arith.addf %121, %123 : vector<8x1xf32>
    %125 = vector.broadcast %117 : vector<8x1xf32> to vector<8x8xf32>
    %126 = arith.mulf %125, %111 : vector<8x8xf32>
    %127 = arith.truncf %120 : vector<8x8xf32> to vector<8x8xbf16>
    %cst_36 = arith.constant dense<0.000000e+00> : vector<8x8xf32>
    %128 = tpu.matmul %127, %108, %cst_36 {dimension_numbers = #tpu.dot_dimension_numbers<[1], [0], [0], [1], [0, 0, 1, 1], [], []>} : vector<8x8xbf16>, vector<8x8xbf16>, vector<8x8xf32> -> vector<8x8xf32>
    %129 = arith.addf %126, %128 : vector<8x8xf32>
    %130 = tpu.reciprocal %124 : vector<8x1xf32> -> vector<8x1xf32>
    %131 = vector.broadcast %130 : vector<8x1xf32> to vector<8x8xf32>
    %132 = arith.mulf %129, %131 : vector<8x8xf32>
    %133 = arith.truncf %132 : vector<8x8xf32> to vector<8x8xbf16>
    %134 = tpu.concatenate %40, %71, %102, %133 in 1 : vector<8x8xbf16>, vector<8x8xbf16>, vector<8x8xbf16>, vector<8x8xbf16> -> vector<8x32xbf16>
    %c0_37 = arith.constant 0 : index
    %c0_38 = arith.constant 0 : index
    %c0_39 = arith.constant 0 : index
    %135 = vector.load %arg6[%c0_37, %c0_38, %c0_39] : memref<1x8x32xf32, #tpu.memory_space<vmem>>, vector<1x8x32xf32>
    %136 = vector.shape_cast %135 : vector<1x8x32xf32> to vector<8x32xf32>
    %cst_40 = arith.constant dense<0.000000e+00> : vector<8x32xf32>
    %137 = tpu.matmul %134, %8, %cst_40 {dimension_numbers = #tpu.dot_dimension_numbers<[1], [0], [0], [1], [0, 0, 1, 1], [], []>} : vector<8x32xbf16>, vector<32x32xbf16>, vector<8x32xf32> -> vector<8x32xf32>
    %138 = arith.addf %136, %137 : vector<8x32xf32>
    %c0_41 = arith.constant 0 : index
    %c0_42 = arith.constant 0 : index
    %c0_43 = arith.constant 0 : index
    %139 = vector.load %arg6[%c0_41, %c0_42, %c0_43] : memref<1x8x32xf32, #tpu.memory_space<vmem>>, vector<1x8x32xf32>
    %140 = vector.shape_cast %139 : vector<1x8x32xf32> to vector<8x32xf32>
    %141 = vector.shape_cast %138 : vector<8x32xf32> to vector<1x8x32xf32>
    tpu.vector_store %arg6[%c0_41, %c0_42, %c0_43], %141 {strides = array<i32>} : memref<1x8x32xf32, #tpu.memory_space<vmem>>, vector<1x8x32xf32>,
    return
  }
  func.func @transform_0(%arg0: i32, %arg1: i32) -> (i32, i32, i32) {
    %c0_i32 = arith.constant 0 : i32
    %c0_i32_0 = arith.constant 0 : i32
    %c0_i32_1 = arith.constant 0 : i32
    return %arg0, %c0_i32, %c0_i32_0 : i32, i32, i32
  }
  func.func @transform_1(%arg0: i32, %arg1: i32) -> (i32, i32, i32) {
    %c0_i32 = arith.constant 0 : i32
    %c0_i32_0 = arith.constant 0 : i32
    %c0_i32_1 = arith.constant 0 : i32
    return %arg1, %c0_i32, %c0_i32_0 : i32, i32, i32
  }
  func.func @transform_2(%arg0: i32, %arg1: i32) -> (i32, i32, i32) {
    %c0_i32 = arith.constant 0 : i32
    %c0_i32_0 = arith.constant 0 : i32
    %c0_i32_1 = arith.constant 0 : i32
    return %arg1, %c0_i32, %c0_i32_0 : i32, i32, i32
  }
  func.func @transform_3(%arg0: i32, %arg1: i32) -> (i32, i32) {
    %c0_i32 = arith.constant 0 : i32
    %c0_i32_0 = arith.constant 0 : i32
    %c0_i32_1 = arith.constant 0 : i32
    return %c0_i32, %c0_i32_0 : i32, i32
  }
  func.func @transform_4(%arg0: i32, %arg1: i32) -> (i32, i32, i32) {
    %c0_i32 = arith.constant 0 : i32
    %c0_i32_0 = arith.constant 0 : i32
    %c0_i32_1 = arith.constant 0 : i32
    return %arg0, %c0_i32, %c0_i32_0 : i32, i32, i32
  }
}

</mosaic_0001>

<llo_original>
// kernel: tpu_custom_call.1
$region0: #{tpu_custom_call.1}
  #allocation0 [shape = 'u32[]', space=smem, size = 0x4, offset = 0x4, fixed_abs, tag = 'smem constant byte address 0x4 - core index']
  #allocation1 [shape = 'u32[144,128]{1,0:T(1,128)}', space=vmem, size = 0x12000, scoped, tag = 'internal scratch']
  %s0 = inlined_call_operand.hbm [shape: bf16[2,8,32], index: 0, kind: input, shape index: {}]
  %s1 = inlined_call_operand.hbm [shape: bf16[1,32,96], index: 1, kind: input, shape index: {}]
  %s2 = inlined_call_operand.hbm [shape: bf16[1,32,32], index: 2, kind: input, shape index: {}]
  %s3 = inlined_call_operand.vmem [shape: f32[1,32], index: 3, kind: input, shape index: {}]
  %s4 = inlined_call_operand.hbm [shape: f32[2,8,32], index: 4, kind: output, shape index: {}]
  %s5 = sld [smem:[#allocation0]]
  $region65: #{tpu_custom_call.1} parent=0
    _
  %s7 = ssub.s32 1, %s5
  %s8 = scalar_select 0, %s7, %s5
  $region1: #{tpu_custom_call.1} parent=0
    #allocation2 [shape = 'u8[4096]{0}', space=vmem, size = 0x1000, scoped, tag = 'input window, operand 0']
    #allocation3 [shape = 's32[2]{0}', space=sflag, size = 0x8, scoped, tag = 'scoped memory for tpu_custom_call.1']
    #allocation4 [shape = 's32[2]{0}', space=sflag, size = 0x8, scoped, tag = 'scoped memory for tpu_custom_call.1']
    #allocation5 [shape = 'u8[8192]{0}', space=vmem, size = 0x2000, scoped, tag = 'input window, operand 1, single buffered']
    #allocation6 [shape = 's32[1]{0}', space=sflag, size = 0x4, scoped, tag = 'scoped memory for tpu_custom_call.1']
    #allocation7 [shape = 'u8[8192]{0}', space=vmem, size = 0x2000, scoped, tag = 'input window, operand 2, single buffered']
    #allocation8 [shape = 'u8[8192]{0}', space=vmem, size = 0x2000, scoped, tag = 'output window, operand 0']
    %9 = vsyncpa [#allocation3], 0
    %s10 = scalar_lea.sflag [#allocation3], 1
    %11 = vsyncpa %s10, 0
    %12 = vsyncpa [#allocation6], 0
    %13 = vsyncpa [#allocation4], 0
    %s14 = scalar_lea.sflag [#allocation4], 1
    %15 = vsyncpa %s14, 0
    loop: start=0, step=1, limit=4
    $region2: #{tpu_custom_call.1} parent=1 // loop_pre_header
      _
    $region3: #{tpu_custom_call.1} parent=1 // loop_header
      %s17 = sphi 0, %s21
      %p18 = scmp.ge.s32.totalorder %s17, 4
      %s24 = sphi 0, %s36
      %s25 = sphi 0, %s32
      %s26 = sphi 0, %s24
      %s27 = sphi 0, %s25
      %s28 = sphi 0, %s26
      %s29 = sphi 0, %s27
      %s39 = sphi 0, %s41
      %s42 = sphi 0, %s39
      %s43 = sphi 0, %s42
      %s59 = sphi 0, %s43
      %s65 = sphi 0, %s67
      %s68 = sphi 0, %s65
      %s69 = sphi 0, %s68
      %s85 = sphi 0, %s69
      %s91 = sphi 0, %s93
      %s94 = sphi 0, %s91
      %s95 = sphi 0, %s94
      %s111 = sphi 0, %s95
      %s115 = sphi 0, %s115
      %s117 = sphi 0, %s115
      %s118 = sphi 0, %s117
      %s132 = sphi 0, %s118
      %s138 = sphi 0, %s140
      %s141 = sphi 0, %s138
      %s142 = sphi 0, %s141
      %s158 = sphi 0, %s142
    $region4: #{tpu_custom_call.1} parent=1 // loop_header_branch
      %20 = sbr.rel (%p18) target = $region8
    $region5: #{tpu_custom_call.1} parent=1 // loop_body
      %s22 = ssub.s32 %s17, 1
      %s23 = ssub.s32 %s17, 2
      %s30 = sadd.s32 1, %s25
      %p31 = scmp.ge.s32.totalorder %s30, 1
      %s32 = scalar_select %p31, 0, %s30
      %s33 = sadd.s32 1, %s24
      %s34 = scalar_select %p31, %s33, %s24
      %p35 = scmp.ge.s32.totalorder %s34, 2
      %s36 = scalar_select %p35, 0, %s34
      %s37 = ssub.s32 %s24, %s36
      %p38 = scmp.eq.s32.totalorder %s37, 0
      %s40 = sadd.s32 %s39, 1
      %s41 = scalar_select %p38, %s39, %s40
      %p44 = pneg %p38
      %p45 = scmp.eq.s32.totalorder %s17, 1
      %p46 = por %p44, %p45
      %p47 = scmp.ne.s32.totalorder %s39, %s42
      %p48 = scmp.eq.s32.totalorder %s17, 0
      %p49 = por %p47, %p48
      %p50 = scmp.ne.s32.totalorder %s39, %s42
      %p51 = scmp.eq.s32.totalorder %s22, 1
      %p52 = por %p50, %p51
      %p53 = scmp.ne.s32.totalorder %s42, %s43
      %p54 = scmp.eq.s32.totalorder %s22, 0
      %p55 = por %p53, %p54
      %p56 = scmp.ne.s32.totalorder %s42, %s43
      %p57 = scmp.eq.s32.totalorder %s23, 1
      %p58 = por %p56, %p57
      %p60 = scmp.ne.s32.totalorder %s43, %s59
      %p61 = scmp.eq.s32.totalorder %s23, 0
      %p62 = por %p60, %p61
      %s63 = ssub.s32 %s25, %s32
      %p64 = scmp.eq.s32.totalorder %s63, 0
      %s66 = sadd.s32 %s65, 1
      %s67 = scalar_select %p64, %s65, %s66
      %p70 = pneg %p64
      %p71 = scmp.eq.s32.totalorder %s17, 1
      %p72 = por %p70, %p71
      %p73 = scmp.ne.s32.totalorder %s65, %s68
      %p74 = scmp.eq.s32.totalorder %s17, 0
      %p75 = por %p73, %p74
      %p76 = scmp.ne.s32.totalorder %s65, %s68
      %p77 = scmp.eq.s32.totalorder %s22, 1
      %p78 = por %p76, %p77
      %p79 = scmp.ne.s32.totalorder %s68, %s69
      %p80 = scmp.eq.s32.totalorder %s22, 0
      %p81 = por %p79, %p80
      %p82 = scmp.ne.s32.totalorder %s68, %s69
      %p83 = scmp.eq.s32.totalorder %s23, 1
      %p84 = por %p82, %p83
      %p86 = scmp.ne.s32.totalorder %s69, %s85
      %p87 = scmp.eq.s32.totalorder %s23, 0
      %p88 = por %p86, %p87
      %s89 = ssub.s32 %s25, %s32
      %p90 = scmp.eq.s32.totalorder %s89, 0
      %s92 = sadd.s32 %s91, 1
      %s93 = scalar_select %p90, %s91, %s92
      %p96 = pneg %p90
      %p97 = scmp.eq.s32.totalorder %s17, 1
      %p98 = por %p96, %p97
      %p99 = scmp.ne.s32.totalorder %s91, %s94
      %p100 = scmp.eq.s32.totalorder %s17, 0
      %p101 = por %p99, %p100
      %p102 = scmp.ne.s32.totalorder %s91, %s94
      %p103 = scmp.eq.s32.totalorder %s22, 1
      %p104 = por %p102, %p103
      %p105 = scmp.ne.s32.totalorder %s94, %s95
      %p106 = scmp.eq.s32.totalorder %s22, 0
      %p107 = por %p105, %p106
      %p108 = scmp.ne.s32.totalorder %s94, %s95
      %p109 = scmp.eq.s32.totalorder %s23, 1
      %p110 = por %p108, %p109
      %p112 = scmp.ne.s32.totalorder %s95, %s111
      %p113 = scmp.eq.s32.totalorder %s23, 0
      %p114 = por %p112, %p113
      %s116 = sadd.s32 %s115, 1
      %p119 = scmp.eq.s32.totalorder %s17, 1
      %p120 = scmp.ne.s32.totalorder %s115, %s117
      %p121 = scmp.eq.s32.totalorder %s17, 0
      %p122 = por %p120, %p121
      %p123 = scmp.ne.s32.totalorder %s115, %s117
      %p124 = scmp.eq.s32.totalorder %s22, 1
      %p125 = por %p123, %p124
      %p126 = scmp.ne.s32.totalorder %s117, %s118
      %p127 = scmp.eq.s32.totalorder %s22, 0
      %p128 = por %p126, %p127
      %p129 = scmp.ne.s32.totalorder %s117, %s118
      %p130 = scmp.eq.s32.totalorder %s23, 1
      %p131 = por %p129, %p130
      %p133 = scmp.ne.s32.totalorder %s118, %s132
      %p134 = scmp.eq.s32.totalorder %s23, 0
      %p135 = por %p133, %p134
      %s136 = ssub.s32 %s24, %s36
      %p137 = scmp.eq.s32.totalorder %s136, 0
      %s139 = sadd.s32 %s138, 1
      %s140 = scalar_select %p137, %s138, %s139
      %p143 = pneg %p137
      %p144 = scmp.eq.s32.totalorder %s17, 1
      %p145 = por %p143, %p144
      %p146 = scmp.ne.s32.totalorder %s138, %s141
      %p147 = scmp.eq.s32.totalorder %s17, 0
      %p148 = por %p146, %p147
      %p149 = scmp.ne.s32.totalorder %s138, %s141
      %p150 = scmp.eq.s32.totalorder %s22, 1
      %p151 = por %p149, %p150
      %p152 = scmp.ne.s32.totalorder %s141, %s142
      %p153 = scmp.eq.s32.totalorder %s22, 0
      %p154 = por %p152, %p153
      %p155 = scmp.ne.s32.totalorder %s141, %s142
      %p156 = scmp.eq.s32.totalorder %s23, 1
      %p157 = por %p155, %p156
      %p159 = scmp.ne.s32.totalorder %s142, %s158
      %p160 = scmp.eq.s32.totalorder %s23, 0
      %p161 = por %p159, %p160
      %p162 = scmp.le.s32.totalorder 1, %s17
      %p163 = scmp.lt.s32.totalorder %s17, 3
      %p164 = pnand %p162, %p163
      %p165 = pneg %p164
      // Predicated region
      $region9: #{tpu_custom_call.1} parent=5 // pred_check
        _
      $region10: #{tpu_custom_call.1} parent=5 // pred_check_branch
        %167 = sbr.rel (%p164) target = $region12
      $region11: #{tpu_custom_call.1} parent=5 // pred_region
        %s168 = ssub.s32 %s17, 1
        // Predicated region
        $region13: #{tpu_custom_call.1} parent=11 // pred_check
          %p169 = pneg %p81
        $region14: #{tpu_custom_call.1} parent=11 // pred_check_branch
          %171 = sbr.rel (%p169) target = $region16
        $region15: #{tpu_custom_call.1} parent=11 // pred_region
          %s173 = ssub.s32 256, 256
          %174 = vsyncadd [#allocation6], %s173
          %s175 = smul.addr %s27, 4
          %s176 = smul.addr %s175, 64
          %s177 = scalar_lea.hbm %s1, %s176
          %s178 = sshll.u32 [#allocation5], 4
          %s179 = int_to_ptr.vmem [resolvable:$true] %s178
          %184 = dma.hbm_to_vmem [thread:$0]  %s177, 256, %s179, [#allocation6], 64, 64, 4
        $region16: #{tpu_custom_call.1} parent=11 // pred_fallthru
          _
        // Predicated region
        $region17: #{tpu_custom_call.1} parent=11 // pred_check
          %p185 = pneg %p107
        $region18: #{tpu_custom_call.1} parent=11 // pred_check_branch
          %187 = sbr.rel (%p185) target = $region20
        $region19: #{tpu_custom_call.1} parent=11 // pred_region
          %s189 = ssub.s32 256, 256
          %190 = vsyncadd [#allocation6], %s189
          %s191 = smul.addr %s27, 4
          %s192 = smul.addr %s191, 64
          %s193 = scalar_lea.hbm %s2, %s192
          %s194 = sshll.u32 [#allocation7], 4
          %s195 = int_to_ptr.vmem [resolvable:$true] %s194
          %200 = dma.hbm_to_vmem [thread:$0]  %s193, 256, %s195, [#allocation6], 64, 64, 4
        $region20: #{tpu_custom_call.1} parent=11 // pred_fallthru
          _
        // Predicated region
        $region21: #{tpu_custom_call.1} parent=11 // pred_check
          %p201 = pneg %p128
        $region22: #{tpu_custom_call.1} parent=11 // pred_check_branch
          %203 = sbr.rel (%p201) target = $region24
        $region23: #{tpu_custom_call.1} parent=11 // pred_region
          _
        $region24: #{tpu_custom_call.1} parent=11 // pred_fallthru
          _
      $region12: #{tpu_custom_call.1} parent=5 // pred_fallthru
        _
      %p204 = scmp.lt.s32.totalorder %s17, 2
      // Predicated region
      $region25: #{tpu_custom_call.1} parent=5 // pred_check
        %p205 = pneg %p204
      $region26: #{tpu_custom_call.1} parent=5 // pred_check_branch
        %207 = sbr.rel (%p205) target = $region28
      $region27: #{tpu_custom_call.1} parent=5 // pred_region
        // Predicated region
        $region29: #{tpu_custom_call.1} parent=27 // pred_check
          %p208 = pneg %p49
        $region30: #{tpu_custom_call.1} parent=27 // pred_check_branch
          %210 = sbr.rel (%p208) target = $region32
        $region31: #{tpu_custom_call.1} parent=27 // pred_region
          %s211 = sand.u32 %s39, 1
          %s212 = scalar_lea.sflag [#allocation3], %s211
          %s213 = sand.u32 %s39, 1
          %s214 = smul.addr %s213, 4
          %s215 = scalar_lea.vmem [#allocation2], %s214
          %s217 = ssub.s32 64, 64
          %218 = vsyncadd %s212, %s217
          %s219 = smul.addr %s24, 64
          %s220 = scalar_lea.hbm %s0, %s219
          %s222 = sshll.u32 %s215, 4
          %s223 = int_to_ptr.vmem [resolvable:$true] %s222
          %225 = dma.hbm_to_vmem [thread:$0]  %s220, 64, %s223, %s212
        $region32: #{tpu_custom_call.1} parent=27 // pred_fallthru
          _
      $region28: #{tpu_custom_call.1} parent=5 // pred_fallthru
        _
      %p226 = scmp.le.s32.totalorder 1, %s17
      %p227 = scmp.lt.s32.totalorder %s17, 3
      %p228 = pnand %p226, %p227
      %p229 = pneg %p228
      // Predicated region
      $region33: #{tpu_custom_call.1} parent=5 // pred_check
        _
      $region34: #{tpu_custom_call.1} parent=5 // pred_check_branch
        %231 = sbr.rel (%p228) target = $region36
      $region35: #{tpu_custom_call.1} parent=5 // pred_region
        %s232 = ssub.s32 %s17, 1
        %s233 = sand.u32 %s42, 1
        %s234 = scalar_lea.sflag [#allocation3], %s233
        %s235 = sand.u32 %s42, 1
        %s236 = smul.addr %s235, 4
        %s237 = scalar_lea.vmem [#allocation2], %s236
        // Predicated region
        $region37: #{tpu_custom_call.1} parent=35 // pred_check
          %p238 = pneg %p55
        $region38: #{tpu_custom_call.1} parent=35 // pred_check_branch
          %240 = sbr.rel (%p238) target = $region40
        $region39: #{tpu_custom_call.1} parent=35 // pred_region
          %241 = dma.done %s234, 64
        $region40: #{tpu_custom_call.1} parent=35 // pred_fallthru
          _
        // Predicated region
        $region41: #{tpu_custom_call.1} parent=35 // pred_check
          %p242 = pneg %p81
        $region42: #{tpu_custom_call.1} parent=35 // pred_check_branch
          %244 = sbr.rel (%p242) target = $region44
        $region43: #{tpu_custom_call.1} parent=35 // pred_region
          %245 = dma.done [#allocation6], 256
        $region44: #{tpu_custom_call.1} parent=35 // pred_fallthru
          _
        // Predicated region
        $region45: #{tpu_custom_call.1} parent=35 // pred_check
          %p246 = pneg %p107
        $region46: #{tpu_custom_call.1} parent=35 // pred_check_branch
          %248 = sbr.rel (%p246) target = $region48
        $region47: #{tpu_custom_call.1} parent=35 // pred_region
          %249 = dma.done [#allocation6], 256
        $region48: #{tpu_custom_call.1} parent=35 // pred_fallthru
          _
        %s250 = sand.u32 %s42, 1
        %s251 = scalar_lea.sflag [#allocation3], %s250
        %s252 = sand.u32 %s42, 1
        %s253 = smul.addr %s252, 4
        %s254 = scalar_lea.vmem [#allocation2], %s253
        %p255 = pneg %p55
        %p256 = pneg %p52
        %p257 = pneg %p81
        %p258 = pneg %p78
        %p259 = pneg %p107
        %p260 = pneg %p104
        %p261 = pneg %p128
        %p262 = pneg %p125
        %p263 = pneg %p154
        %p264 = pneg %p151
        %s265 = sand.u32 %s141, 1
        %s266 = scalar_lea.sflag [#allocation4], %s265
        %s267 = sand.u32 %s141, 1
        %s268 = smul.addr %s267, 8
        %s269 = scalar_lea.vmem [#allocation8], %s268
        %p271 = scmp.eq.s32.totalorder %s27, 0
        // Predicated region
        $region49: #{tpu_custom_call.1} parent=35 // pred_check
          %p272 = pneg %p271
        $region50: #{tpu_custom_call.1} parent=35 // pred_check_branch
          %274 = sbr.rel (%p272) target = $region52
        $region51: #{tpu_custom_call.1} parent=35 // pred_region
          %v275 = vld [vmem:[%s3] sm:$0x1]
          %v277 = vlaneseq
          %v278 = vshrl.u32 %v277, 7
          %v279 = vsub.s32 0, %v278
          %v280 = vrot.slane %v275, %v279
          %vm282 = vcmask 261120
          %283 = vst.msk [vmem:[%s269] sm:$0xff] %vm282, %v280
        $region52: #{tpu_custom_call.1} parent=35 // pred_fallthru
          _
        %v284 = vld [vmem:[%s237] sm:$0xf]
        %v285 = vld [vmem:[#allocation5] sm:$0xf]
        %v286 = vld [vmem:[#allocation5 + $0x4] sm:$0xf]
        %v287 = vld [vmem:[#allocation5 + $0x8] sm:$0xf]
        %v288 = vld [vmem:[#allocation5 + $0xc] sm:$0xf]
        %v289 = vld [vmem:[#allocation7] sm:$0xf]
        %v290 = vld [vmem:[#allocation7 + $0x4] sm:$0xf]
        %v291 = vld [vmem:[#allocation7 + $0x8] sm:$0xf]
        %v292 = vld [vmem:[#allocation7 + $0xc] sm:$0xf]
        %v297 = vunpack.c.l.b16 %v285
        %v298 = vunpack.c.l.b16 %v286
        %v299 = vunpack.c.l.b16 %v287
        %v300 = vunpack.c.l.b16 %v288
        %v301 = vpack.c.b16 %v298, %v297
        %v302 = vpack.c.b16 %v300, %v299
        %vm305 = vcmask 261120
        %v307 = vsel %vm305, %v284, 0
        %309 = vmatprep.subr.bf16.mxu0 0
        %310 = vmatpush1.bf16.msra.mxu0 0
        %311 = vmatprep.subr.bf16.mxu0 0
        %312 = vmatpush1.bf16.msra.mxu0 0
        %313 = vmatprep.subr.bf16.mxu0 0
        %314 = vmatpush1.bf16.msra.mxu0 0
        %315 = vmatprep.subr.bf16.mxu0 0
        %316 = vmatpush1.bf16.msra.mxu0 0
        %317 = vmatprep.subr.bf16.mxu0 0
        %318 = vmatpush1.bf16.msra.mxu0 0
        %319 = vmatprep.subr.bf16.mxu0 0
        %320 = vmatpush1.bf16.msra.mxu0 0
        %321 = vmatprep.subr.bf16.mxu0 0
        %322 = vmatpush1.bf16.msra.mxu0 %v302
        %323 = vmatprep.subr.bf16.mxu0 0
        %324 = vmatpush1.bf16.msra.mxu0 %v301
        %325 = vmatprep.subr.bf16.mxu0 0
        %326 = vmatpush2.bf16.msra.mxu0 0
        %327 = vmatprep.subr.bf16.mxu0 0
        %328 = vmatpush2.bf16.msra.mxu0 0
        %329 = vmatprep.subr.bf16.mxu0 0
        %330 = vmatpush2.bf16.msra.mxu0 0
        %331 = vmatprep.subr.bf16.mxu0 0
        %332 = vmatpush2.bf16.msra.mxu0 0
        %333 = vmatprep.subr.bf16.mxu0 0
        %334 = vmatpush2.bf16.msra.mxu0 0
        %335 = vmatprep.subr.bf16.mxu0 0
        %336 = vmatpush2.bf16.msra.mxu0 0
        %337 = vmatprep.subr.bf16.mxu0 0
        %338 = vmatpush2.bf16.msra.mxu0 0
        %339 = vmatprep.subr.bf16.mxu0 0
        %340 = vmatpush2.bf16.msra.mxu0 0
        %341 = vmatprep.mubr.bf16.mxu0 0
        %342 = vmatmul.mubr.bf16.gmra.mxu0 %v307
        %v343 = vpop.f32.mrf.mxu0
        %v344 = vadd.f32 0.0, %v343
        %v345 = vpop.f32.mrf.mxu0
        %v346 = vpop.f32.mrf.mxu0
        %v347 = vpop.f32.mrf.mxu0
        %348 = vdwg.mxu0
        %v349 = vpack.c.bf16 %v344, %v344
        %351 = vrot.lane.b32.xlu0 %v349, 96
        %v352 = vpop.permute.xlu0 %351
        %vm353 = vcmask 64512
        %v355 = vsel %vm353, %v349, 0
        %v358 = vsel %vm353, %v352, 0
        %360 = vmatprep.subr.bf16.mxu0 0
        %361 = vmatpush1.bf16.xpose.msra.mxu0 0
        %362 = vmatprep.subr.bf16.mxu0 0
        %363 = vmatpush1.bf16.xpose.msra.mxu0 0
        %364 = vmatprep.subr.bf16.mxu0 0
        %365 = vmatpush1.bf16.xpose.msra.mxu0 0
        %366 = vmatprep.subr.bf16.mxu0 0
        %367 = vmatpush1.bf16.xpose.msra.mxu0 0
        %368 = vmatprep.subr.bf16.mxu0 0
        %369 = vmatpush1.bf16.xpose.msra.mxu0 0
        %370 = vmatprep.subr.bf16.mxu0 0
        %371 = vmatpush1.bf16.xpose.msra.mxu0 0
        %372 = vmatprep.subr.bf16.mxu0 0
        %373 = vmatpush1.bf16.xpose.msra.mxu0 0
        %374 = vmatprep.subr.bf16.mxu0 0
        %375 = vmatpush1.bf16.xpose.msra.mxu0 %v358
        %376 = vmatprep.subr.bf16.mxu0 0
        %377 = vmatpush2.bf16.xpose.msra.mxu0 0
        %378 = vmatprep.subr.bf16.mxu0 0
        %379 = vmatpush2.bf16.xpose.msra.mxu0 0
        %380 = vmatprep.subr.bf16.mxu0 0
        %381 = vmatpush2.bf16.xpose.msra.mxu0 0
        %382 = vmatprep.subr.bf16.mxu0 0
        %383 = vmatpush2.bf16.xpose.msra.mxu0 0
        %384 = vmatprep.subr.bf16.mxu0 0
        %385 = vmatpush2.bf16.xpose.msra.mxu0 0
        %386 = vmatprep.subr.bf16.mxu0 0
        %387 = vmatpush2.bf16.xpose.msra.mxu0 0
        %388 = vmatprep.subr.bf16.mxu0 0
        %389 = vmatpush2.bf16.xpose.msra.mxu0 0
        %390 = vmatprep.subr.bf16.mxu0 0
        %391 = vmatpush2.bf16.xpose.msra.mxu0 0
        %392 = vmatprep.mubr.bf16.mxu0 0
        %393 = vmatmul.mubr.bf16.gmra.mxu0 %v355
        %v394 = vpop.f32.mrf.mxu0
        %v395 = vadd.f32 0.0, %v394
        %v396 = vpop.f32.mrf.mxu0
        %v397 = vpop.f32.mrf.mxu0
        %v398 = vpop.f32.mrf.mxu0
        %399 = vdwg.mxu0
        %v400 = vsel %vm353, %v395, -inf
        %401 = vmax.xlane.f32.xlu0 %v400
        %v402 = vpop.xlane.xlu0 %401
        %v403 = vsub.f32 -inf, %v402
        %v404 = vmul.f32 %v403, 1.442695
        %v405 = vpow.pop %v404
        %v406 = vsub.f32 %v395, %v402
        %v407 = vmul.f32 %v406, 1.442695
        %v408 = vpow.pop %v407
        %v409 = vmul.f32 %v405, 0.0
        %v410 = vsel %vm353, %v408, 0.0
        %411 = vadd.xlane.f32.xlu0 %v410
        %v412 = vpop.xlane.xlu0 %411
        %v413 = vadd.f32 %v409, %v412
        %v414 = vpack.c.bf16 %v408, %v408
        %415 = vrot.lane.b32.xlu0 %v349, 64
        %v416 = vpop.permute.xlu0 %415
        %v418 = vsel %vm353, %v414, 0
        %vm420 = vcmask 1043456
        %v422 = vsel %vm420, %v416, 0
        %424 = vmatprep.subr.bf16.mxu0 0
        %425 = vmatpush1.bf16.msra.mxu0 0
        %426 = vmatprep.subr.bf16.mxu0 0
        %427 = vmatpush1.bf16.msra.mxu0 0
        %428 = vmatprep.subr.bf16.mxu0 0
        %429 = vmatpush1.bf16.msra.mxu0 0
        %430 = vmatprep.subr.bf16.mxu0 0
        %431 = vmatpush1.bf16.msra.mxu0 0
        %432 = vmatprep.subr.bf16.mxu0 0
        %433 = vmatpush1.bf16.msra.mxu0 0
        %434 = vmatprep.subr.bf16.mxu0 0
        %435 = vmatpush1.bf16.msra.mxu0 0
        %436 = vmatprep.subr.bf16.mxu0 0
        %437 = vmatpush1.bf16.msra.mxu0 0
        %438 = vmatprep.subr.bf16.mxu0 0
        %439 = vmatpush1.bf16.msra.mxu0 %v422
        %440 = vmatprep.subr.bf16.mxu0 0
        %441 = vmatpush2.bf16.msra.mxu0 0
        %442 = vmatprep.subr.bf16.mxu0 0
        %443 = vmatpush2.bf16.msra.mxu0 0
        %444 = vmatprep.subr.bf16.mxu0 0
        %445 = vmatpush2.bf16.msra.mxu0 0
        %446 = vmatprep.subr.bf16.mxu0 0
        %447 = vmatpush2.bf16.msra.mxu0 0
        %448 = vmatprep.subr.bf16.mxu0 0
        %449 = vmatpush2.bf16.msra.mxu0 0
        %450 = vmatprep.subr.bf16.mxu0 0
        %451 = vmatpush2.bf16.msra.mxu0 0
        %452 = vmatprep.subr.bf16.mxu0 0
        %453 = vmatpush2.bf16.msra.mxu0 0
        %454 = vmatprep.subr.bf16.mxu0 0
        %455 = vmatpush2.bf16.msra.mxu0 0
        %456 = vmatprep.mubr.bf16.mxu0 0
        %457 = vmatmul.mubr.bf16.gmra.mxu0 %v418
        %v458 = vpop.f32.mrf.mxu0
        %v459 = vadd.f32 0.0, %v458
        %v460 = vpop.f32.mrf.mxu0
        %v461 = vpop.f32.mrf.mxu0
        %v462 = vpop.f32.mrf.mxu0
        %463 = vdwg.mxu0
        %v464 = vadd.f32 %v409, %v459
        %v465 = vrcp.pop %v413
        %v466 = vmul.f32 %v464, %v465
        %v467 = vpack.c.bf16 %v466, %v466
        %468 = vrot.lane.b32.xlu0 %v349, 120
        %v469 = vpop.permute.xlu0 %468
        %470 = vrot.lane.b32.xlu0 %v349, 88
        %v471 = vpop.permute.xlu0 %470
        %v473 = vsel %vm353, %v469, 0
        %v476 = vsel %vm353, %v471, 0
        %478 = vmatprep.subr.bf16.mxu0 0
        %479 = vmatpush1.bf16.xpose.msra.mxu0 0
        %480 = vmatprep.subr.bf16.mxu0 0
        %481 = vmatpush1.bf16.xpose.msra.mxu0 0
        %482 = vmatprep.subr.bf16.mxu0 0
        %483 = vmatpush1.bf16.xpose.msra.mxu0 0
        %484 = vmatprep.subr.bf16.mxu0 0
        %485 = vmatpush1.bf16.xpose.msra.mxu0 0
        %486 = vmatprep.subr.bf16.mxu0 0
        %487 = vmatpush1.bf16.xpose.msra.mxu0 0
        %488 = vmatprep.subr.bf16.mxu0 0
        %489 = vmatpush1.bf16.xpose.msra.mxu0 0
        %490 = vmatprep.subr.bf16.mxu0 0
        %491 = vmatpush1.bf16.xpose.msra.mxu0 0
        %492 = vmatprep.subr.bf16.mxu0 0
        %493 = vmatpush1.bf16.xpose.msra.mxu0 %v476
        %494 = vmatprep.subr.bf16.mxu0 0
        %495 = vmatpush2.bf16.xpose.msra.mxu0 0
        %496 = vmatprep.subr.bf16.mxu0 0
        %497 = vmatpush2.bf16.xpose.msra.mxu0 0
        %498 = vmatprep.subr.bf16.mxu0 0
        %499 = vmatpush2.bf16.xpose.msra.mxu0 0
        %500 = vmatprep.subr.bf16.mxu0 0
        %501 = vmatpush2.bf16.xpose.msra.mxu0 0
        %502 = vmatprep.subr.bf16.mxu0 0
        %503 = vmatpush2.bf16.xpose.msra.mxu0 0
        %504 = vmatprep.subr.bf16.mxu0 0
        %505 = vmatpush2.bf16.xpose.msra.mxu0 0
        %506 = vmatprep.subr.bf16.mxu0 0
        %507 = vmatpush2.bf16.xpose.msra.mxu0 0
        %508 = vmatprep.subr.bf16.mxu0 0
        %509 = vmatpush2.bf16.xpose.msra.mxu0 0
        %510 = vmatprep.mubr.bf16.mxu0 0
        %511 = vmatmul.mubr.bf16.gmra.mxu0 %v473
        %v512 = vpop.f32.mrf.mxu0
        %v513 = vadd.f32 0.0, %v512
        %v514 = vpop.f32.mrf.mxu0
        %v515 = vpop.f32.mrf.mxu0
        %v516 = vpop.f32.mrf.mxu0
        %517 = vdwg.mxu0
        %v518 = vsel %vm353, %v513, -inf
        %519 = vmax.xlane.f32.xlu0 %v518
        %v520 = vpop.xlane.xlu0 %519
        %v521 = vsub.f32 -inf, %v520
        %v522 = vmul.f32 %v521, 1.442695
        %v523 = vpow.pop %v522
        %v524 = vsub.f32 %v513, %v520
        %v525 = vmul.f32 %v524, 1.442695
        %v526 = vpow.pop %v525
        %v527 = vmul.f32 %v523, 0.0
        %v528 = vsel %vm353, %v526, 0.0
        %529 = vadd.xlane.f32.xlu0 %v528
        %v530 = vpop.xlane.xlu0 %529
        %v531 = vadd.f32 %v527, %v530
        %v532 = vpack.c.bf16 %v526, %v526
        %533 = vrot.lane.b32.xlu0 %v349, 56
        %v534 = vpop.permute.xlu0 %533
        %v536 = vsel %vm353, %v532, 0
        %v539 = vsel %vm420, %v534, 0
        %541 = vmatprep.subr.bf16.mxu0 0
        %542 = vmatpush1.bf16.msra.mxu0 0
        %543 = vmatprep.subr.bf16.mxu0 0
        %544 = vmatpush1.bf16.msra.mxu0 0
        %545 = vmatprep.subr.bf16.mxu0 0
        %546 = vmatpush1.bf16.msra.mxu0 0
        %547 = vmatprep.subr.bf16.mxu0 0
        %548 = vmatpush1.bf16.msra.mxu0 0
        %549 = vmatprep.subr.bf16.mxu0 0
        %550 = vmatpush1.bf16.msra.mxu0 0
        %551 = vmatprep.subr.bf16.mxu0 0
        %552 = vmatpush1.bf16.msra.mxu0 0
        %553 = vmatprep.subr.bf16.mxu0 0
        %554 = vmatpush1.bf16.msra.mxu0 0
        %555 = vmatprep.subr.bf16.mxu0 0
        %556 = vmatpush1.bf16.msra.mxu0 %v539
        %557 = vmatprep.subr.bf16.mxu0 0
        %558 = vmatpush2.bf16.msra.mxu0 0
        %559 = vmatprep.subr.bf16.mxu0 0
        %560 = vmatpush2.bf16.msra.mxu0 0
        %561 = vmatprep.subr.bf16.mxu0 0
        %562 = vmatpush2.bf16.msra.mxu0 0
        %563 = vmatprep.subr.bf16.mxu0 0
        %564 = vmatpush2.bf16.msra.mxu0 0
        %565 = vmatprep.subr.bf16.mxu0 0
        %566 = vmatpush2.bf16.msra.mxu0 0
        %567 = vmatprep.subr.bf16.mxu0 0
        %568 = vmatpush2.bf16.msra.mxu0 0
        %569 = vmatprep.subr.bf16.mxu0 0
        %570 = vmatpush2.bf16.msra.mxu0 0
        %571 = vmatprep.subr.bf16.mxu0 0
        %572 = vmatpush2.bf16.msra.mxu0 0
        %573 = vmatprep.mubr.bf16.mxu0 0
        %574 = vmatmul.mubr.bf16.gmra.mxu0 %v536
        %v575 = vpop.f32.mrf.mxu0
        %v576 = vadd.f32 0.0, %v575
        %v577 = vpop.f32.mrf.mxu0
        %v578 = vpop.f32.mrf.mxu0
        %v579 = vpop.f32.mrf.mxu0
        %580 = vdwg.mxu0
        %v581 = vadd.f32 %v527, %v576
        %v582 = vrcp.pop %v531
        %v583 = vmul.f32 %v581, %v582
        %v584 = vpack.c.bf16 %v583, %v583
        %585 = vrot.lane.b32.xlu0 %v349, 112
        %v586 = vpop.permute.xlu0 %585
        %587 = vrot.lane.b32.xlu0 %v349, 80
        %v588 = vpop.permute.xlu0 %587
        %v590 = vsel %vm353, %v586, 0
        %v593 = vsel %vm353, %v588, 0
        %595 = vmatprep.subr.bf16.mxu0 0
        %596 = vmatpush1.bf16.xpose.msra.mxu0 0
        %597 = vmatprep.subr.bf16.mxu0 0
        %598 = vmatpush1.bf16.xpose.msra.mxu0 0
        %599 = vmatprep.subr.bf16.mxu0 0
        %600 = vmatpush1.bf16.xpose.msra.mxu0 0
        %601 = vmatprep.subr.bf16.mxu0 0
        %602 = vmatpush1.bf16.xpose.msra.mxu0 0
        %603 = vmatprep.subr.bf16.mxu0 0
        %604 = vmatpush1.bf16.xpose.msra.mxu0 0
        %605 = vmatprep.subr.bf16.mxu0 0
        %606 = vmatpush1.bf16.xpose.msra.mxu0 0
        %607 = vmatprep.subr.bf16.mxu0 0
        %608 = vmatpush1.bf16.xpose.msra.mxu0 0
        %609 = vmatprep.subr.bf16.mxu0 0
        %610 = vmatpush1.bf16.xpose.msra.mxu0 %v593
        %611 = vmatprep.subr.bf16.mxu0 0
        %612 = vmatpush2.bf16.xpose.msra.mxu0 0
        %613 = vmatprep.subr.bf16.mxu0 0
        %614 = vmatpush2.bf16.xpose.msra.mxu0 0
        %615 = vmatprep.subr.bf16.mxu0 0
        %616 = vmatpush2.bf16.xpose.msra.mxu0 0
        %617 = vmatprep.subr.bf16.mxu0 0
        %618 = vmatpush2.bf16.xpose.msra.mxu0 0
        %619 = vmatprep.subr.bf16.mxu0 0
        %620 = vmatpush2.bf16.xpose.msra.mxu0 0
        %621 = vmatprep.subr.bf16.mxu0 0
        %622 = vmatpush2.bf16.xpose.msra.mxu0 0
        %623 = vmatprep.subr.bf16.mxu0 0
        %624 = vmatpush2.bf16.xpose.msra.mxu0 0
        %625 = vmatprep.subr.bf16.mxu0 0
        %626 = vmatpush2.bf16.xpose.msra.mxu0 0
        %627 = vmatprep.mubr.bf16.mxu0 0
        %628 = vmatmul.mubr.bf16.gmra.mxu0 %v590
        %v629 = vpop.f32.mrf.mxu0
        %v630 = vadd.f32 0.0, %v629
        %v631 = vpop.f32.mrf.mxu0
        %v632 = vpop.f32.mrf.mxu0
        %v633 = vpop.f32.mrf.mxu0
        %634 = vdwg.mxu0
        %v635 = vsel %vm353, %v630, -inf
        %636 = vmax.xlane.f32.xlu0 %v635
        %v637 = vpop.xlane.xlu0 %636
        %v638 = vsub.f32 -inf, %v637
        %v639 = vmul.f32 %v638, 1.442695
        %v640 = vpow.pop %v639
        %v641 = vsub.f32 %v630, %v637
        %v642 = vmul.f32 %v641, 1.442695
        %v643 = vpow.pop %v642
        %v644 = vmul.f32 %v640, 0.0
        %v645 = vsel %vm353, %v643, 0.0
        %646 = vadd.xlane.f32.xlu0 %v645
        %v647 = vpop.xlane.xlu0 %646
        %v648 = vadd.f32 %v644, %v647
        %v649 = vpack.c.bf16 %v643, %v643
        %650 = vrot.lane.b32.xlu0 %v349, 48
        %v651 = vpop.permute.xlu0 %650
        %v653 = vsel %vm353, %v649, 0
        %v656 = vsel %vm420, %v651, 0
        %658 = vmatprep.subr.bf16.mxu0 0
        %659 = vmatpush1.bf16.msra.mxu0 0
        %660 = vmatprep.subr.bf16.mxu0 0
        %661 = vmatpush1.bf16.msra.mxu0 0
        %662 = vmatprep.subr.bf16.mxu0 0
        %663 = vmatpush1.bf16.msra.mxu0 0
        %664 = vmatprep.subr.bf16.mxu0 0
        %665 = vmatpush1.bf16.msra.mxu0 0
        %666 = vmatprep.subr.bf16.mxu0 0
        %667 = vmatpush1.bf16.msra.mxu0 0
        %668 = vmatprep.subr.bf16.mxu0 0
        %669 = vmatpush1.bf16.msra.mxu0 0
        %670 = vmatprep.subr.bf16.mxu0 0
        %671 = vmatpush1.bf16.msra.mxu0 0
        %672 = vmatprep.subr.bf16.mxu0 0
        %673 = vmatpush1.bf16.msra.mxu0 %v656
        %674 = vmatprep.subr.bf16.mxu0 0
        %675 = vmatpush2.bf16.msra.mxu0 0
        %676 = vmatprep.subr.bf16.mxu0 0
        %677 = vmatpush2.bf16.msra.mxu0 0
        %678 = vmatprep.subr.bf16.mxu0 0
        %679 = vmatpush2.bf16.msra.mxu0 0
        %680 = vmatprep.subr.bf16.mxu0 0
        %681 = vmatpush2.bf16.msra.mxu0 0
        %682 = vmatprep.subr.bf16.mxu0 0
        %683 = vmatpush2.bf16.msra.mxu0 0
        %684 = vmatprep.subr.bf16.mxu0 0
        %685 = vmatpush2.bf16.msra.mxu0 0
        %686 = vmatprep.subr.bf16.mxu0 0
        %687 = vmatpush2.bf16.msra.mxu0 0
        %688 = vmatprep.subr.bf16.mxu0 0
        %689 = vmatpush2.bf16.msra.mxu0 0
        %690 = vmatprep.mubr.bf16.mxu0 0
        %691 = vmatmul.mubr.bf16.gmra.mxu0 %v653
        %v692 = vpop.f32.mrf.mxu0
        %v693 = vadd.f32 0.0, %v692
        %v694 = vpop.f32.mrf.mxu0
        %v695 = vpop.f32.mrf.mxu0
        %v696 = vpop.f32.mrf.mxu0
        %697 = vdwg.mxu0
        %v698 = vadd.f32 %v644, %v693
        %v699 = vrcp.pop %v648
        %v700 = vmul.f32 %v698, %v699
        %v701 = vpack.c.bf16 %v700, %v700
        %702 = vrot.lane.b32.xlu0 %v349, 104
        %v703 = vpop.permute.xlu0 %702
        %704 = vrot.lane.b32.xlu0 %v349, 72
        %v705 = vpop.permute.xlu0 %704
        %v707 = vsel %vm353, %v703, 0
        %v710 = vsel %vm353, %v705, 0
        %712 = vmatprep.subr.bf16.mxu0 0
        %713 = vmatpush1.bf16.xpose.msra.mxu0 0
        %714 = vmatprep.subr.bf16.mxu0 0
        %715 = vmatpush1.bf16.xpose.msra.mxu0 0
        %716 = vmatprep.subr.bf16.mxu0 0
        %717 = vmatpush1.bf16.xpose.msra.mxu0 0
        %718 = vmatprep.subr.bf16.mxu0 0
        %719 = vmatpush1.bf16.xpose.msra.mxu0 0
        %720 = vmatprep.subr.bf16.mxu0 0
        %721 = vmatpush1.bf16.xpose.msra.mxu0 0
        %722 = vmatprep.subr.bf16.mxu0 0
        %723 = vmatpush1.bf16.xpose.msra.mxu0 0
        %724 = vmatprep.subr.bf16.mxu0 0
        %725 = vmatpush1.bf16.xpose.msra.mxu0 0
        %726 = vmatprep.subr.bf16.mxu0 0
        %727 = vmatpush1.bf16.xpose.msra.mxu0 %v710
        %728 = vmatprep.subr.bf16.mxu0 0
        %729 = vmatpush2.bf16.xpose.msra.mxu0 0
        %730 = vmatprep.subr.bf16.mxu0 0
        %731 = vmatpush2.bf16.xpose.msra.mxu0 0
        %732 = vmatprep.subr.bf16.mxu0 0
        %733 = vmatpush2.bf16.xpose.msra.mxu0 0
        %734 = vmatprep.subr.bf16.mxu0 0
        %735 = vmatpush2.bf16.xpose.msra.mxu0 0
        %736 = vmatprep.subr.bf16.mxu0 0
        %737 = vmatpush2.bf16.xpose.msra.mxu0 0
        %738 = vmatprep.subr.bf16.mxu0 0
        %739 = vmatpush2.bf16.xpose.msra.mxu0 0
        %740 = vmatprep.subr.bf16.mxu0 0
        %741 = vmatpush2.bf16.xpose.msra.mxu0 0
        %742 = vmatprep.subr.bf16.mxu0 0
        %743 = vmatpush2.bf16.xpose.msra.mxu0 0
        %744 = vmatprep.mubr.bf16.mxu0 0
        %745 = vmatmul.mubr.bf16.gmra.mxu0 %v707
        %v746 = vpop.f32.mrf.mxu0
        %v747 = vadd.f32 0.0, %v746
        %v748 = vpop.f32.mrf.mxu0
        %v749 = vpop.f32.mrf.mxu0
        %v750 = vpop.f32.mrf.mxu0
        %751 = vdwg.mxu0
        %v752 = vsel %vm353, %v747, -inf
        %753 = vmax.xlane.f32.xlu0 %v752
        %v754 = vpop.xlane.xlu0 %753
        %v755 = vsub.f32 -inf, %v754
        %v756 = vmul.f32 %v755, 1.442695
        %v757 = vpow.pop %v756
        %v758 = vsub.f32 %v747, %v754
        %v759 = vmul.f32 %v758, 1.442695
        %v760 = vpow.pop %v759
        %v761 = vmul.f32 %v757, 0.0
        %v762 = vsel %vm353, %v760, 0.0
        %763 = vadd.xlane.f32.xlu0 %v762
        %v764 = vpop.xlane.xlu0 %763
        %v765 = vadd.f32 %v761, %v764
        %v766 = vpack.c.bf16 %v760, %v760
        %767 = vrot.lane.b32.xlu0 %v349, 40
        %v768 = vpop.permute.xlu0 %767
        %v770 = vsel %vm353, %v766, 0
        %v773 = vsel %vm420, %v768, 0
        %775 = vmatprep.subr.bf16.mxu0 0
        %776 = vmatpush1.bf16.msra.mxu0 0
        %777 = vmatprep.subr.bf16.mxu0 0
        %778 = vmatpush1.bf16.msra.mxu0 0
        %779 = vmatprep.subr.bf16.mxu0 0
        %780 = vmatpush1.bf16.msra.mxu0 0
        %781 = vmatprep.subr.bf16.mxu0 0
        %782 = vmatpush1.bf16.msra.mxu0 0
        %783 = vmatprep.subr.bf16.mxu0 0
        %784 = vmatpush1.bf16.msra.mxu0 0
        %785 = vmatprep.subr.bf16.mxu0 0
        %786 = vmatpush1.bf16.msra.mxu0 0
        %787 = vmatprep.subr.bf16.mxu0 0
        %788 = vmatpush1.bf16.msra.mxu0 0
        %789 = vmatprep.subr.bf16.mxu0 0
        %790 = vmatpush1.bf16.msra.mxu0 %v773
        %791 = vmatprep.subr.bf16.mxu0 0
        %792 = vmatpush2.bf16.msra.mxu0 0
        %793 = vmatprep.subr.bf16.mxu0 0
        %794 = vmatpush2.bf16.msra.mxu0 0
        %795 = vmatprep.subr.bf16.mxu0 0
        %796 = vmatpush2.bf16.msra.mxu0 0
        %797 = vmatprep.subr.bf16.mxu0 0
        %798 = vmatpush2.bf16.msra.mxu0 0
        %799 = vmatprep.subr.bf16.mxu0 0
        %800 = vmatpush2.bf16.msra.mxu0 0
        %801 = vmatprep.subr.bf16.mxu0 0
        %802 = vmatpush2.bf16.msra.mxu0 0
        %803 = vmatprep.subr.bf16.mxu0 0
        %804 = vmatpush2.bf16.msra.mxu0 0
        %805 = vmatprep.subr.bf16.mxu0 0
        %806 = vmatpush2.bf16.msra.mxu0 0
        %807 = vmatprep.mubr.bf16.mxu0 0
        %808 = vmatmul.mubr.bf16.gmra.mxu0 %v770
        %v809 = vpop.f32.mrf.mxu0
        %v810 = vadd.f32 0.0, %v809
        %v811 = vpop.f32.mrf.mxu0
        %v812 = vpop.f32.mrf.mxu0
        %v813 = vpop.f32.mrf.mxu0
        %814 = vdwg.mxu0
        %v815 = vadd.f32 %v761, %v810
        %v816 = vrcp.pop %v765
        %v817 = vmul.f32 %v815, %v816
        %v818 = vpack.c.bf16 %v817, %v817
        %820 = vrot.lane.b32.xlu0 %v584, 8
        %v821 = vpop.permute.xlu0 %820
        %823 = vrot.lane.b32.xlu0 %v701, 16
        %v824 = vpop.permute.xlu0 %823
        %826 = vrot.lane.b32.xlu0 %v818, 24
        %v827 = vpop.permute.xlu0 %826
        %v830 = vsel %vm353, %v467, %v821
        %vm831 = vcmask 130048
        %v833 = vsel %vm831, %v830, %v824
        %vm834 = vcmask 195584
        %v836 = vsel %vm834, %v833, %v827
        %v837 = vld [vmem:[%s269] sm:$0xff]
        %v842 = vunpack.c.l.b16 %v289
        %v843 = vunpack.c.l.b16 %v290
        %v844 = vunpack.c.l.b16 %v291
        %v845 = vunpack.c.l.b16 %v292
        %v846 = vpack.c.b16 %v843, %v842
        %v847 = vpack.c.b16 %v845, %v844
        %v850 = vsel %vm305, %v836, 0
        %852 = vmatprep.subr.bf16.mxu0 0
        %853 = vmatpush1.bf16.msra.mxu0 0
        %854 = vmatprep.subr.bf16.mxu0 0
        %855 = vmatpush1.bf16.msra.mxu0 0
        %856 = vmatprep.subr.bf16.mxu0 0
        %857 = vmatpush1.bf16.msra.mxu0 0
        %858 = vmatprep.subr.bf16.mxu0 0
        %859 = vmatpush1.bf16.msra.mxu0 0
        %860 = vmatprep.subr.bf16.mxu0 0
        %861 = vmatpush1.bf16.msra.mxu0 0
        %862 = vmatprep.subr.bf16.mxu0 0
        %863 = vmatpush1.bf16.msra.mxu0 0
        %864 = vmatprep.subr.bf16.mxu0 0
        %865 = vmatpush1.bf16.msra.mxu0 %v847
        %866 = vmatprep.subr.bf16.mxu0 0
        %867 = vmatpush1.bf16.msra.mxu0 %v846
        %868 = vmatprep.subr.bf16.mxu0 0
        %869 = vmatpush2.bf16.msra.mxu0 0
        %870 = vmatprep.subr.bf16.mxu0 0
        %871 = vmatpush2.bf16.msra.mxu0 0
        %872 = vmatprep.subr.bf16.mxu0 0
        %873 = vmatpush2.bf16.msra.mxu0 0
        %874 = vmatprep.subr.bf16.mxu0 0
        %875 = vmatpush2.bf16.msra.mxu0 0
        %876 = vmatprep.subr.bf16.mxu0 0
        %877 = vmatpush2.bf16.msra.mxu0 0
        %878 = vmatprep.subr.bf16.mxu0 0
        %879 = vmatpush2.bf16.msra.mxu0 0
        %880 = vmatprep.subr.bf16.mxu0 0
        %881 = vmatpush2.bf16.msra.mxu0 0
        %882 = vmatprep.subr.bf16.mxu0 0
        %883 = vmatpush2.bf16.msra.mxu0 0
        %884 = vmatprep.mubr.bf16.mxu0 0
        %885 = vmatmul.mubr.bf16.gmra.mxu0 %v850
        %v886 = vpop.f32.mrf.mxu0
        %v887 = vadd.f32 0.0, %v886
        %v888 = vpop.f32.mrf.mxu0
        %v889 = vpop.f32.mrf.mxu0
        %v890 = vpop.f32.mrf.mxu0
        %891 = vdwg.mxu0
        %v892 = vadd.f32 %v837, %v887
        %893 = vst.msk [vmem:[%s269] sm:$0xff] %vm305, %v892
        %s894 = sand.u32 %s141, 1
        %s895 = scalar_lea.sflag [#allocation4], %s894
        %s896 = sand.u32 %s141, 1
        %s897 = smul.addr %s896, 8
        %s898 = scalar_lea.vmem [#allocation8], %s897
        // Predicated region
        $region53: #{tpu_custom_call.1} parent=35 // pred_check
          %p899 = pneg %p151
        $region54: #{tpu_custom_call.1} parent=35 // pred_check_branch
          %901 = sbr.rel (%p899) target = $region56
        $region55: #{tpu_custom_call.1} parent=35 // pred_region
          %s903 = ssub.s32 128, 128
          %904 = vsyncadd %s895, %s903
          %s905 = smul.addr %s26, 128
          %s906 = scalar_lea.hbm %s4, %s905
          %s908 = sshll.u32 %s898, 4
          %s909 = int_to_ptr.vmem [resolvable:$true] %s908
          %911 = dma.vmem_to_hbm [thread:$0]  %s909, 128, %s906, %s895
        $region56: #{tpu_custom_call.1} parent=35 // pred_fallthru
          _
      $region36: #{tpu_custom_call.1} parent=5 // pred_fallthru
        _
      %p912 = scmp.le.s32.totalorder 2, %s17
      // Predicated region
      $region57: #{tpu_custom_call.1} parent=5 // pred_check
        %p913 = pneg %p912
      $region58: #{tpu_custom_call.1} parent=5 // pred_check_branch
        %915 = sbr.rel (%p913) target = $region60
      $region59: #{tpu_custom_call.1} parent=5 // pred_region
        %s916 = ssub.s32 %s17, 2
        // Predicated region
        $region61: #{tpu_custom_call.1} parent=59 // pred_check
          %p917 = pneg %p157
        $region62: #{tpu_custom_call.1} parent=59 // pred_check_branch
          %919 = sbr.rel (%p917) target = $region64
        $region63: #{tpu_custom_call.1} parent=59 // pred_region
          %s920 = sand.u32 %s142, 1
          %s921 = scalar_lea.sflag [#allocation4], %s920
          %s922 = sand.u32 %s142, 1
          %s923 = smul.addr %s922, 8
          %s924 = scalar_lea.vmem [#allocation8], %s923
          %925 = dma.done %s921, 128
        $region64: #{tpu_custom_call.1} parent=59 // pred_fallthru
          _
      $region60: #{tpu_custom_call.1} parent=5 // pred_fallthru
        _
    $region6: #{tpu_custom_call.1} parent=1 // loop_footer
      %s21 = sadd.s32 1, %s17
    $region7: #{tpu_custom_call.1} parent=1 // loop_footer_branch
      %16 = sbr.rel target = $region3
    $region8: #{tpu_custom_call.1} parent=1 // loop_exit
      _
    %926 = vsyncpa [#allocation3], 1
    %s927 = scalar_lea.sflag [#allocation3], 1
    %928 = vsyncpa %s927, 1
    %929 = vsyncpa [#allocation6], 1
    %930 = vsyncpa [#allocation4], 1
    %s931 = scalar_lea.sflag [#allocation4], 1
    %932 = vsyncpa %s931, 1

</llo_original>
